<compile_context>
chip_gen: v6e
topology: v6e:2x2x1
jax: 0.10.0
libtpu: 0.0.40
codegen_flags: <defaults>
</compile_context>

<pallas_src>
import jax
import jax.numpy as jnp
from jax import lax
from jax.experimental import pallas as pl
from jax.experimental.pallas import tpu as pltpu

MAX_ORDER = 4
MIN_C = 1.0  # min_fn='min', min_c=1.0 (module defaults)
# TODO(synk): min_fn='tanh', enable_recall and the verbose-logging branch are not
# implemented (the module asserts enable_prec and not enable_recall).


def _round_up(x, m):
    return (x + m - 1) // m * m


def _vmem_budget_bytes():
    """Generation-aware VMEM budget: ~48 MiB on v7x (64 MiB/TC), ~96 MiB on v5e/v6e."""
    cap = 64 * 1024 * 1024  # conservative fallback (v7x per-TensorCore)
    try:
        info = pltpu.get_tpu_info()
        cap = int(getattr(info, "vmem_capacity_bytes", cap))
    except Exception:
        pass
    return max(16 * 1024 * 1024, min(cap * 3 // 4, 112 * 1024 * 1024))


def _choose_tiles(B, SX, SY, V, itemsize, budget):
    """Pick (B_TILE, V_TILE, num_v) so the double-buffered X block is MiB-scale
    but the total working set stays under the per-generation VMEM budget."""
    # Batch tile: largest divisor of B keeping rows and the f32 XY scratch modest.
    bt = 1
    for cand in range(1, B + 1):
        if B % cand:
            continue
        rows_ok = (cand * SX <= 1024) or cand == 1
        scratch_ok = cand * SX * SY * 4 <= budget // 8
        if rows_ok and scratch_ok:
            bt = cand
    # Vocab tile: target ~2 MiB per X block, capped by the double-buffered budget.
    row_bytes = max(1, bt * SX * itemsize)
    scratch_bytes = bt * SX * SY * 4
    margin = 4 * 1024 * 1024
    avail = max(128 * row_bytes * 2, budget - margin - scratch_bytes)
    max_vt = max(128, (avail // (2 * row_bytes)) // 128 * 128)
    target_vt = max(128, ((2 * 1024 * 1024) // row_bytes) // 128 * 128)
    vt = max(128, min(max_vt, target_vt, _round_up(V, 128)))
    num_v = -(-V // vt)
    return bt, vt, num_v


def _make_mbleu_kernel(V, need_mask):
    def kernel(x_ref, y_ref, mx_ref, my_ref, o_ref, xy_acc):
        # x_ref : (BT, SX, VT)   bf16/f32  -- batch tile, current vocab tile
        # y_ref : (BT, SY, 1)    i32       -- Y tokens, sublane-major (lane-dense onehot)
        # mx_ref: (BT, 1, SX+1)  f32
        # my_ref: (BT, 1, SY+1)  f32
        # o_ref : (BT, 1, MAX_ORDER) f32   -- same block across the vocab axis
        # xy_acc: (BT, SX, SY)   f32 VMEM scratch accumulating gather(X, Y)
        v_idx = pl.program_id(1)
        num_v = pl.num_programs(1)

        BT, SX, VT = x_ref.shape
        SY = y_ref.shape[1]

        @pl.when(v_idx == 0)
        def _init():
            xy_acc[...] = jnp.zeros_like(xy_acc)

        # ---- hot loop: gather-as-matmul on this vocab tile -------------------
        # XY[b, i, j] += sum_v X[b, i, v] * [base + v == Y[b, j]]
        x_blk = x_ref[...]                                     # (BT, SX, VT)
        y_col = y_ref[...]                                     # (BT, SY, 1) i32
        base = v_idx * VT
        vocab_ids = lax.broadcasted_iota(jnp.int32, (BT, SY, VT), 2) + base
        onehot = (vocab_ids == y_col).astype(x_blk.dtype)      # lane-dense (BT, SY, VT)
        if need_mask:
            # Ragged last tile: lanes beyond V hold unspecified data (could be
            # NaN); select them to exact zero before the matmul.
            lane_ids = lax.broadcasted_iota(jnp.int32, (1, 1, VT), 2) + base
            x_blk = jnp.where(lane_ids < V, x_blk, jnp.zeros((), x_blk.dtype))
        xy_acc[...] += jnp.einsum("bxv,byv->bxy", x_blk, onehot,
                                  preferred_element_type=jnp.float32)

        # ---- cold epilogue: per-order soft n-gram precision (once / batch tile)
        @pl.when(v_idx == num_v - 1)
        def _epilogue():
            one = jnp.float32(1.0)
            XY = xy_acc[...]                                   # (BT, SX, SY) f32
            Yv = y_col[:, :, 0]                                # (BT, SY)
            maskX = mx_ref[...][:, 0, :]                       # (BT, SX+1)
            maskY = my_ref[...][:, 0, :]                       # (BT, SY+1)

            YY = (Yv[:, :, None] == Yv[:, None, :]).astype(jnp.float32)
            matchXY = maskX[:, :, None] * maskY[:, None, :]            # (BT,SX+1,SY+1)
            matchYY = jnp.minimum(maskY[:, :, None], maskY[:, None, :])  # (BT,SY+1,SY+1)

            out_iota = lax.broadcasted_iota(jnp.int32, (BT, 1, MAX_ORDER), 2)
            out_acc = jnp.zeros((BT, 1, MAX_ORDER), jnp.float32)

            # TODO(synk): for large SY consider hoisting this once-per-batch
            # recurrence into its own small pallas_call to keep the vocab
            # streaming loop tight.
            for order in range(1, MAX_ORDER + 1):
                matchXY = XY[:, :SX - order + 1, :SY - order + 1] * matchXY[:, 1:, 1:]
                matchYY = YY[:, :SY - order + 1, :SY - order + 1] * matchYY[:, 1:, 1:]
                # Sublane-only reductions: cntYX sums the SX axis; matchYY is
                # exactly symmetric, so summing its first (sublane) axis equals
                # the reference's lane-axis sum (no cross-lane reduce).
                cntYX = jnp.sum(matchXY, axis=1, keepdims=True)          # (BT,1,Ny)
                cntYY = jnp.sum(matchYY, axis=1, keepdims=True)          # (BT,1,Ny)
                inv_cntYY = pl.reciprocal(jnp.maximum(one, cntYY))       # exact
                ratio = cntYY * pl.reciprocal(cntYX - matchXY + one)     # exact
                term = jnp.minimum(jnp.float32(MIN_C), ratio) * matchXY * inv_cntYY
                total = jnp.sum(jnp.sum(term, axis=2, keepdims=True),
                                axis=1, keepdims=True)                   # (BT,1,1)
                out_acc = out_acc + jnp.where(out_iota == (order - 1), total, 0.0)

            o_ref[...] = out_acc                               # (BT, 1, MAX_ORDER)

    return kernel


def mbleu_o_x_pallas(X, Y, maskX, maskY):
    """Returns o_X_ of shape (B, MAX_ORDER): per-order soft n-gram match counts.

    X is streamed in its incoming dtype (bf16 recommended for HBM-bound cases);
    accumulation is always f32 so the one-hot gather is exact in any dtype.
    """
    B, SX, V = X.shape
    SY = Y.shape[1]

    itemsize = jnp.dtype(X.dtype).itemsize
    budget = _vmem_budget_bytes()
    bt, vt, num_v = _choose_tiles(B, SX, SY, V, itemsize, budget)
    need_mask = (num_v * vt) != V  # ragged last vocab tile handled in-kernel

    # Only the small side inputs are reshaped/cast (no copy of the big X tensor).
    Y3 = Y.astype(jnp.int32).reshape(B, SY, 1)
    mX3 = maskX.astype(jnp.float32).reshape(B, 1, SX + 1)
    mY3 = maskY.astype(jnp.float32).reshape(B, 1, SY + 1)

    cost = pl.CostEstimate(
        flops=2 * B * SX * SY * num_v * vt,
        transcendentals=0,
        bytes_accessed=B * SX * V * itemsize + B * SY * 4
        + B * (SX + SY + 2) * 4 + B * MAX_ORDER * 4,
    )

    out = pl.pallas_call(
        _make_mbleu_kernel(V, need_mask),
        out_shape=jax.ShapeDtypeStruct((B, 1, MAX_ORDER), jnp.float32),
        grid_spec=pltpu.PrefetchScalarGridSpec(
            num_scalar_prefetch=0,
            grid=(B // bt, num_v),
            in_specs=[
                pl.BlockSpec((bt, SX, vt), lambda b, v: (b, 0, v)),
                pl.BlockSpec((bt, SY, 1), lambda b, v: (b, 0, 0)),
                pl.BlockSpec((bt, 1, SX + 1), lambda b, v: (b, 0, 0)),
                pl.BlockSpec((bt, 1, SY + 1), lambda b, v: (b, 0, 0)),
            ],
            out_specs=pl.BlockSpec((bt, 1, MAX_ORDER), lambda b, v: (b, 0, 0)),
            scratch_shapes=[pltpu.VMEM((bt, SX, SY), jnp.float32)],
        ),
        compiler_params=pltpu.CompilerParams(
            # Batch axis shards across TensorCores (v7x megacore); vocab axis is
            # the resident-accumulator reduction axis.
            dimension_semantics=("parallel", "arbitrary"),
            vmem_limit_bytes=int(budget),
        ),
        cost_estimate=cost,
    )(X, Y3, mX3, mY3)
    return out.reshape(B, MAX_ORDER)


def mbleu_forward(Y, X, lenY, lenX, maskY, maskX, recall_w=0.0):
    """Matches mBLEU.forward with enable_prec=True, enable_recall=False."""
    o_X_ = mbleu_o_x_pallas(X, Y, maskX, maskY)                         # (B, MAX_ORDER)
    orders = jnp.arange(1, MAX_ORDER + 1, dtype=jnp.float32)
    tot_X_ = jnp.maximum(1.0, lenX[:, None] - (orders[None, :] - 1.0))  # (B, MAX_ORDER)

    w = jnp.array([0.1, 0.3, 0.3, 0.3], dtype=jnp.float32)
    o_X = o_X_.sum(0) / tot_X_.sum(0)                                   # (MAX_ORDER,)
    neglog_o_X = -jnp.log(o_X + 1e-9)
    neglog_o_X_weighted = neglog_o_X * w
    neglog_geomean_X = neglog_o_X_weighted.sum(-1)
    neglog_bp = jnp.maximum(0.0, lenY.sum() / lenX.sum() - 1.0)
    loss = (1.0 - recall_w) * neglog_geomean_X + neglog_bp
    return loss, (1.0 - recall_w) * neglog_o_X_weighted


def mbleu_reference(Y, X, lenY, lenX, maskY, maskX):
    """Pure-JAX transcription of the PyTorch forward (for validation)."""
    X = X.astype(jnp.float32)
    B, SX, V = X.shape
    SY = Y.shape[1]
    idx = jnp.broadcast_to(Y[:, None, :], (B, SX, SY))
    XY = jnp.take_along_axis(X, idx, axis=2)
    YY = (Y[:, :, None] == Y[:, None, :]).astype(jnp.float32)
    matchXY = maskX[:, :, None] * maskY[:, None, :]
    matchYY = jnp.minimum(maskY[:, :, None], maskY[:, None, :])
    o_list, tot_list = [], []
    for order in range(1, MAX_ORDER + 1):
        matchXY = XY[:, :SX - order + 1, :SY - order + 1] * matchXY[:, 1:, 1:]
        matchYY = YY[:, :SY - order + 1, :SY - order + 1] * matchYY[:, 1:, 1:]
        cntYX = matchXY.sum(1)
        cntYY = matchYY.sum(2)
        o_order = (jnp.minimum(MIN_C, cntYY[:, None, :] / (cntYX[:, None, :] - matchXY + 1.0))
                   * matchXY / jnp.maximum(1.0, cntYY)[:, None, :]).sum(2)
        o_list.append(o_order.sum(1))
        tot_list.append(jnp.maximum(1.0, lenX - (order - 1)))
    o_X_ = jnp.stack(o_list, 1)
    tot_X_ = jnp.stack(tot_list, 1)
    w = jnp.array([0.1, 0.3, 0.3, 0.3], jnp.float32)
    o_X = o_X_.sum(0) / tot_X_.sum(0)
    weighted = -jnp.log(o_X + 1e-9) * w
    neglog_bp = jnp.maximum(0.0, lenY.sum() / lenX.sum() - 1.0)
    return weighted.sum() + neglog_bp, weighted


if __name__ == "__main__":
    key = jax.random.PRNGKey(0)
    B, SX, SY, V = 2, 8, 8, 32

    kx, ky = jax.random.split(key)
    X = jax.nn.softmax(jax.random.normal(kx, (B, SX, V), dtype=jnp.float32), axis=-1)
    # Stream X in bf16 (its typical native dtype); the one-hot gather is exact in
    # bf16 with f32 accumulation, so the f32 reference on the same values matches.
    X = X.astype(jnp.bfloat16)
    Y = jax.random.randint(ky, (B, SY), 0, V, dtype=jnp.int32)
    lenX = jnp.array([8.0, 6.0], dtype=jnp.float32)
    lenY = jnp.array([7.0, 8.0], dtype=jnp.float32)
    maskX = (jnp.arange(SX + 1)[None, :] <= lenX[:, None]).astype(jnp.float32)  # (B, SX+1)
    maskY = (jnp.arange(SY + 1)[None, :] <= lenY[:, None]).astype(jnp.float32)  # (B, SY+1)

    loss, weighted = mbleu_forward(Y, X, lenY, lenX, maskY, maskX)
    loss = jax.block_until_ready(loss)
    weighted = jax.block_until_ready(weighted)

    ref_loss, ref_weighted = mbleu_reference(Y, X, lenY, lenX, maskY, maskX)
    assert jnp.allclose(loss, ref_loss, rtol=1e-4, atol=1e-5), (loss, ref_loss)
    assert jnp.allclose(weighted, ref_weighted, rtol=1e-4, atol=1e-5), (weighted, ref_weighted)

    print("KERNEL_OK")
</pallas_src>

<mosaic_0001>
module attributes {stable_mosaic.version = 11 : i64} {
  func.func @kernel(%arg0: i32, %arg1: i32, %arg2: memref<2x8x128xbf16, #tpu.memory_space<vmem>>, %arg3: memref<2x8x1xi32, #tpu.memory_space<vmem>>, %arg4: memref<2x1x9xf32, #tpu.memory_space<vmem>>, %arg5: memref<2x1x9xf32, #tpu.memory_space<vmem>>, %arg6: memref<2x1x4xf32, #tpu.memory_space<vmem>>, %arg7: memref<2x8x8xf32, #tpu.memory_space<vmem>>) attributes {dimension_semantics = [#tpu.dimension_semantics<parallel>, #tpu.dimension_semantics<arbitrary>], iteration_bounds = array<i64: 1, 1>, scalar_prefetch = 0 : i64, scratch_operands = 1 : i64, tpu.core_type = #tpu.core_type<tc>, window_params = [{transform_indices = @transform_0, window_bounds = array<i64: 2, 8, 128>}, {transform_indices = @transform_1, window_bounds = array<i64: 2, 8, 1>}, {transform_indices = @transform_2, window_bounds = array<i64: 2, 1, 9>}, {transform_indices = @transform_3, window_bounds = array<i64: 2, 1, 9>}, {transform_indices = @transform_4, window_bounds = array<i64: 2, 1, 4>}]} {
    %c0_i32 = arith.constant 0 : i32
    %0 = arith.cmpi eq, %arg1, %c0_i32 : i32
    %1 = arith.extui %0 : i1 to i32
    %c0_i32_0 = arith.constant 0 : i32
    %2 = arith.cmpi ne, %1, %c0_i32_0 : i32
    scf.if %2 {
      %cst_15 = arith.constant 0.000000e+00 : f32
      %30 = vector.broadcast %cst_15 : f32 to vector<2x8x8xf32>
      %c0_16 = arith.constant 0 : index
      %c0_17 = arith.constant 0 : index
      %c0_18 = arith.constant 0 : index
      %31 = vector.load %arg7[%c0_16, %c0_17, %c0_18] : memref<2x8x8xf32, #tpu.memory_space<vmem>>, vector<2x8x8xf32>
      tpu.vector_store %arg7[%c0_16, %c0_17, %c0_18], %30 {strides = array<i32>} : memref<2x8x8xf32, #tpu.memory_space<vmem>>, vector<2x8x8xf32>,
    } else {
    }
    %c0 = arith.constant 0 : index
    %c0_1 = arith.constant 0 : index
    %c0_2 = arith.constant 0 : index
    %3 = vector.load %arg2[%c0, %c0_1, %c0_2] : memref<2x8x128xbf16, #tpu.memory_space<vmem>>, vector<2x8x128xbf16>
    %c0_3 = arith.constant 0 : index
    %c0_4 = arith.constant 0 : index
    %c0_5 = arith.constant 0 : index
    %4 = vector.load %arg3[%c0_3, %c0_4, %c0_5] : memref<2x8x1xi32, #tpu.memory_space<vmem>>, vector<2x8x1xi32>
    %c128_i32 = arith.constant 128 : i32
    %5 = arith.muli %arg1, %c128_i32 : i32
    %6 = tpu.iota {dimensions = array<i32: 2>} : vector<2x8x128xi32>
    %7 = vector.broadcast %5 : i32 to vector<2x8x128xi32>
    %8 = arith.addi %6, %7 : vector<2x8x128xi32>
    %9 = vector.broadcast %4 : vector<2x8x1xi32> to vector<2x8x128xi32>
    %10 = arith.cmpi eq, %8, %9 : vector<2x8x128xi32>
    %11 = arith.extui %10 : vector<2x8x128xi1> to vector<2x8x128xi32>
    %12 = arith.sitofp %11 : vector<2x8x128xi32> to vector<2x8x128xf32>
    %13 = arith.truncf %12 : vector<2x8x128xf32> to vector<2x8x128xbf16>
    %14 = tpu.iota {dimensions = array<i32: 2>} : vector<1x1x128xi32>
    %15 = vector.broadcast %5 : i32 to vector<1x1x128xi32>
    %16 = arith.addi %14, %15 : vector<1x1x128xi32>
    %c32_i32 = arith.constant 32 : i32
    %17 = vector.broadcast %c32_i32 : i32 to vector<1x1x128xi32>
    %18 = arith.cmpi slt, %16, %17 : vector<1x1x128xi32>
    %cst = arith.constant 0.000000e+00 : bf16
    %19 = vector.shape_cast %18 : vector<1x1x128xi1> to vector<1x1x128xi1>
    %20 = vector.broadcast %19 : vector<1x1x128xi1> to vector<2x8x128xi1>
    %21 = vector.broadcast %cst : bf16 to vector<2x8x128xbf16>
    %22 = arith.select %20, %3, %21 : vector<2x8x128xi1>, vector<2x8x128xbf16>
    %c0_6 = arith.constant 0 : index
    %c0_7 = arith.constant 0 : index
    %c0_8 = arith.constant 0 : index
    %23 = vector.load %arg7[%c0_6, %c0_7, %c0_8] : memref<2x8x8xf32, #tpu.memory_space<vmem>>, vector<2x8x8xf32>
    "tpu.trace_start"() <{level = 10 : i32, message = "bxv,byv->bxy"}> : () -> ()
    %cst_9 = arith.constant dense<0.000000e+00> : vector<2x8x8xf32>
    %24 = tpu.matmul %22, %13, %cst_9 {dimension_numbers = #tpu.dot_dimension_numbers<[2], [2], [1], [1], [0, 0, 0, 1, 1, 1], [0], [0]>} : vector<2x8x128xbf16>, vector<2x8x128xbf16>, vector<2x8x8xf32> -> vector<2x8x8xf32>
    "tpu.trace_stop"() : () -> ()
    %25 = arith.addf %23, %24 : vector<2x8x8xf32>
    %c0_10 = arith.constant 0 : index
    %c0_11 = arith.constant 0 : index
    %c0_12 = arith.constant 0 : index
    %26 = vector.load %arg7[%c0_10, %c0_11, %c0_12] : memref<2x8x8xf32, #tpu.memory_space<vmem>>, vector<2x8x8xf32>
    tpu.vector_store %arg7[%c0_10, %c0_11, %c0_12], %25 {strides = array<i32>} : memref<2x8x8xf32, #tpu.memory_space<vmem>>, vector<2x8x8xf32>,
    %c0_i32_13 = arith.constant 0 : i32
    %27 = arith.cmpi eq, %arg1, %c0_i32_13 : i32
    %28 = arith.extui %27 : i1 to i32
    %c0_i32_14 = arith.constant 0 : i32
    %29 = arith.cmpi ne, %28, %c0_i32_14 : i32
    scf.if %29 {
      %c0_15 = arith.constant 0 : index
      %c0_16 = arith.constant 0 : index
      %c0_17 = arith.constant 0 : index
      %30 = vector.load %arg7[%c0_15, %c0_16, %c0_17] : memref<2x8x8xf32, #tpu.memory_space<vmem>>, vector<2x8x8xf32>
      %31 = vector.shape_cast %4 : vector<2x8x1xi32> to vector<2x8xi32>
      %c0_18 = arith.constant 0 : index
      %c0_19 = arith.constant 0 : index
      %c0_20 = arith.constant 0 : index
      %32 = vector.load %arg4[%c0_18, %c0_19, %c0_20] : memref<2x1x9xf32, #tpu.memory_space<vmem>>, vector<2x1x9xf32>
      %33 = vector.shape_cast %32 : vector<2x1x9xf32> to vector<2x9xf32>
      %c0_21 = arith.constant 0 : index
      %c0_22 = arith.constant 0 : index
      %c0_23 = arith.constant 0 : index
      %34 = vector.load %arg5[%c0_21, %c0_22, %c0_23] : memref<2x1x9xf32, #tpu.memory_space<vmem>>, vector<2x1x9xf32>
      %35 = vector.shape_cast %34 : vector<2x1x9xf32> to vector<2x9xf32>
      %36 = vector.shape_cast %31 : vector<2x8xi32> to vector<2x8x1xi32>
      %37 = vector.shape_cast %31 : vector<2x8xi32> to vector<2x1x8xi32>
      %38 = vector.broadcast %36 : vector<2x8x1xi32> to vector<2x8x8xi32>
      %39 = vector.broadcast %37 : vector<2x1x8xi32> to vector<2x8x8xi32>
      %40 = arith.cmpi eq, %38, %39 : vector<2x8x8xi32>
      %41 = arith.extui %40 : vector<2x8x8xi1> to vector<2x8x8xi32>
      %42 = arith.sitofp %41 : vector<2x8x8xi32> to vector<2x8x8xf32>
      %43 = vector.shape_cast %33 : vector<2x9xf32> to vector<2x9x1xf32>
      %44 = vector.shape_cast %35 : vector<2x9xf32> to vector<2x1x9xf32>
      %45 = vector.broadcast %43 : vector<2x9x1xf32> to vector<2x9x9xf32>
      %46 = vector.broadcast %44 : vector<2x1x9xf32> to vector<2x9x9xf32>
      %47 = arith.mulf %45, %46 : vector<2x9x9xf32>
      %48 = vector.shape_cast %35 : vector<2x9xf32> to vector<2x9x1xf32>
      %49 = vector.shape_cast %35 : vector<2x9xf32> to vector<2x1x9xf32>
      %50 = vector.broadcast %48 : vector<2x9x1xf32> to vector<2x9x9xf32>
      %51 = vector.broadcast %49 : vector<2x1x9xf32> to vector<2x9x9xf32>
      %52 = arith.minimumf %50, %51 : vector<2x9x9xf32>
      %53 = tpu.iota {dimensions = array<i32: 2>} : vector<2x1x4xi32>
      %cst_24 = arith.constant 0.000000e+00 : f32
      %54 = vector.broadcast %cst_24 : f32 to vector<2x1x4xf32>
      %55 = vector.extract_strided_slice %47 {offsets = [0, 1, 1], sizes = [2, 8, 8], strides = [1, 1, 1]} : vector<2x9x9xf32> to vector<2x8x8xf32>
      %56 = arith.mulf %30, %55 : vector<2x8x8xf32>
      %57 = vector.extract_strided_slice %52 {offsets = [0, 1, 1], sizes = [2, 8, 8], strides = [1, 1, 1]} : vector<2x9x9xf32> to vector<2x8x8xf32>
      %58 = arith.mulf %42, %57 : vector<2x8x8xf32>
      %cst_25 = arith.constant dense<0.000000e+00> : vector<2x8xf32>
      %59 = vector.multi_reduction <add>, %56, %cst_25 [1] : vector<2x8x8xf32> to vector<2x8xf32>
      %60 = vector.shape_cast %59 : vector<2x8xf32> to vector<2x1x8xf32>
      %cst_26 = arith.constant dense<0.000000e+00> : vector<2x8xf32>
      %61 = vector.multi_reduction <add>, %58, %cst_26 [1] : vector<2x8x8xf32> to vector<2x8xf32>
      %62 = vector.shape_cast %61 : vector<2x8xf32> to vector<2x1x8xf32>
      %cst_27 = arith.constant 1.000000e+00 : f32
      %63 = vector.broadcast %cst_27 : f32 to vector<2x1x8xf32>
      %64 = arith.maximumf %63, %62 : vector<2x1x8xf32>
      %65 = tpu.reciprocal %64 : vector<2x1x8xf32> -> vector<2x1x8xf32>
      %66 = vector.broadcast %60 : vector<2x1x8xf32> to vector<2x8x8xf32>
      %67 = arith.subf %66, %56 : vector<2x8x8xf32>
      %cst_28 = arith.constant 1.000000e+00 : f32
      %68 = vector.broadcast %cst_28 : f32 to vector<2x8x8xf32>
      %69 = arith.addf %67, %68 : vector<2x8x8xf32>
      %70 = tpu.reciprocal %69 : vector<2x8x8xf32> -> vector<2x8x8xf32>
      %71 = vector.broadcast %62 : vector<2x1x8xf32> to vector<2x8x8xf32>
      %72 = arith.mulf %71, %70 : vector<2x8x8xf32>
      %cst_29 = arith.constant 1.000000e+00 : f32
      %73 = vector.broadcast %cst_29 : f32 to vector<2x8x8xf32>
      %74 = arith.minimumf %73, %72 : vector<2x8x8xf32>
      %75 = arith.mulf %74, %56 : vector<2x8x8xf32>
      %76 = vector.broadcast %65 : vector<2x1x8xf32> to vector<2x8x8xf32>
      %77 = arith.mulf %75, %76 : vector<2x8x8xf32>
      %cst_30 = arith.constant dense<0.000000e+00> : vector<2x8xf32>
      %78 = vector.multi_reduction <add>, %77, %cst_30 [2] : vector<2x8x8xf32> to vector<2x8xf32>
      %79 = vector.shape_cast %78 : vector<2x8xf32> to vector<2x8x1xf32>
      %cst_31 = arith.constant dense<0.000000e+00> : vector<2x1xf32>
      %80 = vector.multi_reduction <add>, %79, %cst_31 [1] : vector<2x8x1xf32> to vector<2x1xf32>
      %81 = vector.shape_cast %80 : vector<2x1xf32> to vector<2x1x1xf32>
      %c0_i32_32 = arith.constant 0 : i32
      %82 = vector.broadcast %c0_i32_32 : i32 to vector<2x1x4xi32>
      %83 = arith.cmpi eq, %53, %82 : vector<2x1x4xi32>
      %cst_33 = arith.constant 0.000000e+00 : f32
      %84 = vector.shape_cast %81 : vector<2x1x1xf32> to vector<2x1x1xf32>
      %85 = vector.broadcast %84 : vector<2x1x1xf32> to vector<2x1x4xf32>
      %86 = vector.broadcast %cst_33 : f32 to vector<2x1x4xf32>
      %87 = arith.select %83, %85, %86 : vector<2x1x4xi1>, vector<2x1x4xf32>
      %88 = arith.addf %54, %87 : vector<2x1x4xf32>
      %89 = vector.extract_strided_slice %30 {offsets = [0, 0, 0], sizes = [2, 7, 7], strides = [1, 1, 1]} : vector<2x8x8xf32> to vector<2x7x7xf32>
      %90 = vector.extract_strided_slice %56 {offsets = [0, 1, 1], sizes = [2, 7, 7], strides = [1, 1, 1]} : vector<2x8x8xf32> to vector<2x7x7xf32>
      %91 = arith.mulf %89, %90 : vector<2x7x7xf32>
      %92 = vector.extract_strided_slice %42 {offsets = [0, 0, 0], sizes = [2, 7, 7], strides = [1, 1, 1]} : vector<2x8x8xf32> to vector<2x7x7xf32>
      %93 = vector.extract_strided_slice %58 {offsets = [0, 1, 1], sizes = [2, 7, 7], strides = [1, 1, 1]} : vector<2x8x8xf32> to vector<2x7x7xf32>
      %94 = arith.mulf %92, %93 : vector<2x7x7xf32>
      %cst_34 = arith.constant dense<0.000000e+00> : vector<2x7xf32>
      %95 = vector.multi_reduction <add>, %91, %cst_34 [1] : vector<2x7x7xf32> to vector<2x7xf32>
      %96 = vector.shape_cast %95 : vector<2x7xf32> to vector<2x1x7xf32>
      %cst_35 = arith.constant dense<0.000000e+00> : vector<2x7xf32>
      %97 = vector.multi_reduction <add>, %94, %cst_35 [1] : vector<2x7x7xf32> to vector<2x7xf32>
      %98 = vector.shape_cast %97 : vector<2x7xf32> to vector<2x1x7xf32>
      %cst_36 = arith.constant 1.000000e+00 : f32
      %99 = vector.broadcast %cst_36 : f32 to vector<2x1x7xf32>
      %100 = arith.maximumf %99, %98 : vector<2x1x7xf32>
      %101 = tpu.reciprocal %100 : vector<2x1x7xf32> -> vector<2x1x7xf32>
      %102 = vector.broadcast %96 : vector<2x1x7xf32> to vector<2x7x7xf32>
      %103 = arith.subf %102, %91 : vector<2x7x7xf32>
      %cst_37 = arith.constant 1.000000e+00 : f32
      %104 = vector.broadcast %cst_37 : f32 to vector<2x7x7xf32>
      %105 = arith.addf %103, %104 : vector<2x7x7xf32>
      %106 = tpu.reciprocal %105 : vector<2x7x7xf32> -> vector<2x7x7xf32>
      %107 = vector.broadcast %98 : vector<2x1x7xf32> to vector<2x7x7xf32>
      %108 = arith.mulf %107, %106 : vector<2x7x7xf32>
      %cst_38 = arith.constant 1.000000e+00 : f32
      %109 = vector.broadcast %cst_38 : f32 to vector<2x7x7xf32>
      %110 = arith.minimumf %109, %108 : vector<2x7x7xf32>
      %111 = arith.mulf %110, %91 : vector<2x7x7xf32>
      %112 = vector.broadcast %101 : vector<2x1x7xf32> to vector<2x7x7xf32>
      %113 = arith.mulf %111, %112 : vector<2x7x7xf32>
      %cst_39 = arith.constant dense<0.000000e+00> : vector<2x7xf32>
      %114 = vector.multi_reduction <add>, %113, %cst_39 [2] : vector<2x7x7xf32> to vector<2x7xf32>
      %115 = vector.shape_cast %114 : vector<2x7xf32> to vector<2x7x1xf32>
      %cst_40 = arith.constant dense<0.000000e+00> : vector<2x1xf32>
      %116 = vector.multi_reduction <add>, %115, %cst_40 [1] : vector<2x7x1xf32> to vector<2x1xf32>
      %117 = vector.shape_cast %116 : vector<2x1xf32> to vector<2x1x1xf32>
      %c1_i32 = arith.constant 1 : i32
      %118 = vector.broadcast %c1_i32 : i32 to vector<2x1x4xi32>
      %119 = arith.cmpi eq, %53, %118 : vector<2x1x4xi32>
      %cst_41 = arith.constant 0.000000e+00 : f32
      %120 = vector.shape_cast %117 : vector<2x1x1xf32> to vector<2x1x1xf32>
      %121 = vector.broadcast %120 : vector<2x1x1xf32> to vector<2x1x4xf32>
      %122 = vector.broadcast %cst_41 : f32 to vector<2x1x4xf32>
      %123 = arith.select %119, %121, %122 : vector<2x1x4xi1>, vector<2x1x4xf32>
      %124 = arith.addf %88, %123 : vector<2x1x4xf32>
      %125 = vector.extract_strided_slice %30 {offsets = [0, 0, 0], sizes = [2, 6, 6], strides = [1, 1, 1]} : vector<2x8x8xf32> to vector<2x6x6xf32>
      %126 = vector.extract_strided_slice %91 {offsets = [0, 1, 1], sizes = [2, 6, 6], strides = [1, 1, 1]} : vector<2x7x7xf32> to vector<2x6x6xf32>
      %127 = arith.mulf %125, %126 : vector<2x6x6xf32>
      %128 = vector.extract_strided_slice %42 {offsets = [0, 0, 0], sizes = [2, 6, 6], strides = [1, 1, 1]} : vector<2x8x8xf32> to vector<2x6x6xf32>
      %129 = vector.extract_strided_slice %94 {offsets = [0, 1, 1], sizes = [2, 6, 6], strides = [1, 1, 1]} : vector<2x7x7xf32> to vector<2x6x6xf32>
      %130 = arith.mulf %128, %129 : vector<2x6x6xf32>
      %cst_42 = arith.constant dense<0.000000e+00> : vector<2x6xf32>
      %131 = vector.multi_reduction <add>, %127, %cst_42 [1] : vector<2x6x6xf32> to vector<2x6xf32>
      %132 = vector.shape_cast %131 : vector<2x6xf32> to vector<2x1x6xf32>
      %cst_43 = arith.constant dense<0.000000e+00> : vector<2x6xf32>
      %133 = vector.multi_reduction <add>, %130, %cst_43 [1] : vector<2x6x6xf32> to vector<2x6xf32>
      %134 = vector.shape_cast %133 : vector<2x6xf32> to vector<2x1x6xf32>
      %cst_44 = arith.constant 1.000000e+00 : f32
      %135 = vector.broadcast %cst_44 : f32 to vector<2x1x6xf32>
      %136 = arith.maximumf %135, %134 : vector<2x1x6xf32>
      %137 = tpu.reciprocal %136 : vector<2x1x6xf32> -> vector<2x1x6xf32>
      %138 = vector.broadcast %132 : vector<2x1x6xf32> to vector<2x6x6xf32>
      %139 = arith.subf %138, %127 : vector<2x6x6xf32>
      %cst_45 = arith.constant 1.000000e+00 : f32
      %140 = vector.broadcast %cst_45 : f32 to vector<2x6x6xf32>
      %141 = arith.addf %139, %140 : vector<2x6x6xf32>
      %142 = tpu.reciprocal %141 : vector<2x6x6xf32> -> vector<2x6x6xf32>
      %143 = vector.broadcast %134 : vector<2x1x6xf32> to vector<2x6x6xf32>
      %144 = arith.mulf %143, %142 : vector<2x6x6xf32>
      %cst_46 = arith.constant 1.000000e+00 : f32
      %145 = vector.broadcast %cst_46 : f32 to vector<2x6x6xf32>
      %146 = arith.minimumf %145, %144 : vector<2x6x6xf32>
      %147 = arith.mulf %146, %127 : vector<2x6x6xf32>
      %148 = vector.broadcast %137 : vector<2x1x6xf32> to vector<2x6x6xf32>
      %149 = arith.mulf %147, %148 : vector<2x6x6xf32>
      %cst_47 = arith.constant dense<0.000000e+00> : vector<2x6xf32>
      %150 = vector.multi_reduction <add>, %149, %cst_47 [2] : vector<2x6x6xf32> to vector<2x6xf32>
      %151 = vector.shape_cast %150 : vector<2x6xf32> to vector<2x6x1xf32>
      %cst_48 = arith.constant dense<0.000000e+00> : vector<2x1xf32>
      %152 = vector.multi_reduction <add>, %151, %cst_48 [1] : vector<2x6x1xf32> to vector<2x1xf32>
      %153 = vector.shape_cast %152 : vector<2x1xf32> to vector<2x1x1xf32>
      %c2_i32 = arith.constant 2 : i32
      %154 = vector.broadcast %c2_i32 : i32 to vector<2x1x4xi32>
      %155 = arith.cmpi eq, %53, %154 : vector<2x1x4xi32>
      %cst_49 = arith.constant 0.000000e+00 : f32
      %156 = vector.shape_cast %153 : vector<2x1x1xf32> to vector<2x1x1xf32>
      %157 = vector.broadcast %156 : vector<2x1x1xf32> to vector<2x1x4xf32>
      %158 = vector.broadcast %cst_49 : f32 to vector<2x1x4xf32>
      %159 = arith.select %155, %157, %158 : vector<2x1x4xi1>, vector<2x1x4xf32>
      %160 = arith.addf %124, %159 : vector<2x1x4xf32>
      %161 = vector.extract_strided_slice %30 {offsets = [0, 0, 0], sizes = [2, 5, 5], strides = [1, 1, 1]} : vector<2x8x8xf32> to vector<2x5x5xf32>
      %162 = vector.extract_strided_slice %127 {offsets = [0, 1, 1], sizes = [2, 5, 5], strides = [1, 1, 1]} : vector<2x6x6xf32> to vector<2x5x5xf32>
      %163 = arith.mulf %161, %162 : vector<2x5x5xf32>
      %164 = vector.extract_strided_slice %42 {offsets = [0, 0, 0], sizes = [2, 5, 5], strides = [1, 1, 1]} : vector<2x8x8xf32> to vector<2x5x5xf32>
      %165 = vector.extract_strided_slice %130 {offsets = [0, 1, 1], sizes = [2, 5, 5], strides = [1, 1, 1]} : vector<2x6x6xf32> to vector<2x5x5xf32>
      %166 = arith.mulf %164, %165 : vector<2x5x5xf32>
      %cst_50 = arith.constant dense<0.000000e+00> : vector<2x5xf32>
      %167 = vector.multi_reduction <add>, %163, %cst_50 [1] : vector<2x5x5xf32> to vector<2x5xf32>
      %168 = vector.shape_cast %167 : vector<2x5xf32> to vector<2x1x5xf32>
      %cst_51 = arith.constant dense<0.000000e+00> : vector<2x5xf32>
      %169 = vector.multi_reduction <add>, %166, %cst_51 [1] : vector<2x5x5xf32> to vector<2x5xf32>
      %170 = vector.shape_cast %169 : vector<2x5xf32> to vector<2x1x5xf32>
      %cst_52 = arith.constant 1.000000e+00 : f32
      %171 = vector.broadcast %cst_52 : f32 to vector<2x1x5xf32>
      %172 = arith.maximumf %171, %170 : vector<2x1x5xf32>
      %173 = tpu.reciprocal %172 : vector<2x1x5xf32> -> vector<2x1x5xf32>
      %174 = vector.broadcast %168 : vector<2x1x5xf32> to vector<2x5x5xf32>
      %175 = arith.subf %174, %163 : vector<2x5x5xf32>
      %cst_53 = arith.constant 1.000000e+00 : f32
      %176 = vector.broadcast %cst_53 : f32 to vector<2x5x5xf32>
      %177 = arith.addf %175, %176 : vector<2x5x5xf32>
      %178 = tpu.reciprocal %177 : vector<2x5x5xf32> -> vector<2x5x5xf32>
      %179 = vector.broadcast %170 : vector<2x1x5xf32> to vector<2x5x5xf32>
      %180 = arith.mulf %179, %178 : vector<2x5x5xf32>
      %cst_54 = arith.constant 1.000000e+00 : f32
      %181 = vector.broadcast %cst_54 : f32 to vector<2x5x5xf32>
      %182 = arith.minimumf %181, %180 : vector<2x5x5xf32>
      %183 = arith.mulf %182, %163 : vector<2x5x5xf32>
      %184 = vector.broadcast %173 : vector<2x1x5xf32> to vector<2x5x5xf32>
      %185 = arith.mulf %183, %184 : vector<2x5x5xf32>
      %cst_55 = arith.constant dense<0.000000e+00> : vector<2x5xf32>
      %186 = vector.multi_reduction <add>, %185, %cst_55 [2] : vector<2x5x5xf32> to vector<2x5xf32>
      %187 = vector.shape_cast %186 : vector<2x5xf32> to vector<2x5x1xf32>
      %cst_56 = arith.constant dense<0.000000e+00> : vector<2x1xf32>
      %188 = vector.multi_reduction <add>, %187, %cst_56 [1] : vector<2x5x1xf32> to vector<2x1xf32>
      %189 = vector.shape_cast %188 : vector<2x1xf32> to vector<2x1x1xf32>
      %c3_i32 = arith.constant 3 : i32
      %190 = vector.broadcast %c3_i32 : i32 to vector<2x1x4xi32>
      %191 = arith.cmpi eq, %53, %190 : vector<2x1x4xi32>
      %cst_57 = arith.constant 0.000000e+00 : f32
      %192 = vector.shape_cast %189 : vector<2x1x1xf32> to vector<2x1x1xf32>
      %193 = vector.broadcast %192 : vector<2x1x1xf32> to vector<2x1x4xf32>
      %194 = vector.broadcast %cst_57 : f32 to vector<2x1x4xf32>
      %195 = arith.select %191, %193, %194 : vector<2x1x4xi1>, vector<2x1x4xf32>
      %196 = arith.addf %160, %195 : vector<2x1x4xf32>
      %c0_58 = arith.constant 0 : index
      %c0_59 = arith.constant 0 : index
      %c0_60 = arith.constant 0 : index
      %197 = vector.load %arg6[%c0_58, %c0_59, %c0_60] : memref<2x1x4xf32, #tpu.memory_space<vmem>>, vector<2x1x4xf32>
      tpu.vector_store %arg6[%c0_58, %c0_59, %c0_60], %196 {strides = array<i32>} : memref<2x1x4xf32, #tpu.memory_space<vmem>>, vector<2x1x4xf32>,
    } else {
    }
    return
  }
  func.func @transform_0(%arg0: i32, %arg1: i32) -> (i32, i32, i32) {
    %c0_i32 = arith.constant 0 : i32
    %c0_i32_0 = arith.constant 0 : i32
    return %arg0, %c0_i32, %arg1 : i32, i32, i32
  }
  func.func @transform_1(%arg0: i32, %arg1: i32) -> (i32, i32, i32) {
    %c0_i32 = arith.constant 0 : i32
    %c0_i32_0 = arith.constant 0 : i32
    %c0_i32_1 = arith.constant 0 : i32
    return %arg0, %c0_i32, %c0_i32_0 : i32, i32, i32
  }
  func.func @transform_2(%arg0: i32, %arg1: i32) -> (i32, i32, i32) {
    %c0_i32 = arith.constant 0 : i32
    %c0_i32_0 = arith.constant 0 : i32
    %c0_i32_1 = arith.constant 0 : i32
    return %arg0, %c0_i32, %c0_i32_0 : i32, i32, i32
  }
  func.func @transform_3(%arg0: i32, %arg1: i32) -> (i32, i32, i32) {
    %c0_i32 = arith.constant 0 : i32
    %c0_i32_0 = arith.constant 0 : i32
    %c0_i32_1 = arith.constant 0 : i32
    return %arg0, %c0_i32, %c0_i32_0 : i32, i32, i32
  }
  func.func @transform_4(%arg0: i32, %arg1: i32) -> (i32, i32, i32) {
    %c0_i32 = arith.constant 0 : i32
    %c0_i32_0 = arith.constant 0 : i32
    %c0_i32_1 = arith.constant 0 : i32
    return %arg0, %c0_i32, %c0_i32_0 : i32, i32, i32
  }
}

</mosaic_0001>

<llo_original>
// kernel: tpu_custom_call.1
$region0: #{tpu_custom_call.1}
  #allocation0 [shape = 'u32[]', space=smem, size = 0x4, offset = 0x4, fixed_abs, tag = 'smem constant byte address 0x4 - core index']
  #allocation1 [shape = 'u32[144,128]{1,0:T(1,128)}', space=vmem, size = 0x12000, scoped, tag = 'internal scratch']
  #allocation2 [shape = 'f32[2,8,8]{2,1,0:T(8,128)}', space=vmem, size = 0x2000, scoped, tag = 'scratch operand']
  %s0 = inlined_call_operand.vmem [shape: bf16[2,8,32], index: 0, kind: input, shape index: {}]
  %s1 = inlined_call_operand.vmem [shape: s32[2,8,1], index: 1, kind: input, shape index: {}]
  %s2 = inlined_call_operand.vmem [shape: f32[2,1,9], index: 2, kind: input, shape index: {}]
  %s3 = inlined_call_operand.vmem [shape: f32[2,1,9], index: 3, kind: input, shape index: {}]
  %s4 = inlined_call_operand.hbm [shape: f32[2,1,4], index: 4, kind: output, shape index: {}]
  %s5 = sld [smem:[#allocation0]]
  $region34: #{tpu_custom_call.1} parent=0
    _
  %s7 = ssub.s32 1, %s5
  %s8 = scalar_select 0, %s7, %s5
  $region1: #{tpu_custom_call.1} parent=0
    #allocation3 [shape = 'u8[1024]{0}', space=vmem, size = 0x400, scoped, tag = 'output window, operand 0, single buffered']
    #allocation4 [shape = 's32[1]{0}', space=sflag, size = 0x4, scoped, tag = 'scoped memory for tpu_custom_call.1']
    %9 = vsyncpa [#allocation4], 0
    // Predicated region
    $region2: #{tpu_custom_call.1} parent=1 // pred_check
      _
    $region3: #{tpu_custom_call.1} parent=1 // pred_check_branch
      %11 = sbr.rel (0) target = $region5
    $region4: #{tpu_custom_call.1} parent=1 // pred_region
      _
    $region5: #{tpu_custom_call.1} parent=1 // pred_fallthru
      _
    // Predicated region
    $region6: #{tpu_custom_call.1} parent=1 // pred_check
      _
    $region7: #{tpu_custom_call.1} parent=1 // pred_check_branch
      %13 = sbr.rel (0) target = $region9
    $region8: #{tpu_custom_call.1} parent=1 // pred_region
      _
    $region9: #{tpu_custom_call.1} parent=1 // pred_fallthru
      _
    // Predicated region
    $region10: #{tpu_custom_call.1} parent=1 // pred_check
      _
    $region11: #{tpu_custom_call.1} parent=1 // pred_check_branch
      %15 = sbr.rel (0) target = $region13
    $region12: #{tpu_custom_call.1} parent=1 // pred_region
      _
    $region13: #{tpu_custom_call.1} parent=1 // pred_fallthru
      _
    // Predicated region
    $region14: #{tpu_custom_call.1} parent=1 // pred_check
      _
    $region15: #{tpu_custom_call.1} parent=1 // pred_check_branch
      %17 = sbr.rel (0) target = $region17
    $region16: #{tpu_custom_call.1} parent=1 // pred_region
      _
    $region17: #{tpu_custom_call.1} parent=1 // pred_fallthru
      _
    %p19 = scmp.eq.s32.totalorder 0, 0
    // Predicated region
    $region18: #{tpu_custom_call.1} parent=1 // pred_check
      %p20 = pneg %p19
    $region19: #{tpu_custom_call.1} parent=1 // pred_check_branch
      %22 = sbr.rel (%p20) target = $region21
    $region20: #{tpu_custom_call.1} parent=1 // pred_region
      %vm23 = vcmask 64512
      %24 = vst.msk [vmem:[#allocation2] sm:$0xff] %vm23, 0.0
      %25 = vst.msk [vmem:[#allocation2 + $0x8] sm:$0xff] %vm23, 0.0
    $region21: #{tpu_custom_call.1} parent=1 // pred_fallthru
      _
    %v26 = vld [vmem:[%s0] sm:$0xf]
    %v27 = vld [vmem:[%s0 + $0x4] sm:$0xf]
    %v28 = vld [vmem:[%s1] sm:$0xff]
    %v29 = vld [vmem:[%s1 + $0x8] sm:$0xff]
    %s30 = smul.u32 0, 128
    %v31 = vlaneseq
    %v32 = vand.u32 %v31, 127
    %v33 = vstv %s30
    %v34 = vadd.s32 %v32, %v33
    %35 = vset.pattern.permute.xlu0 0
    %36 = vperm.xlu0 %35, %v28
    %v37 = vpop.permute.xlu0 %36
    %38 = vset.pattern.permute.xlu0 0
    %39 = vperm.xlu0 %38, %v29
    %v40 = vpop.permute.xlu0 %39
    %vm41 = vcmp.eq.s32.totalorder %v34, %v37
    %vm42 = vcmp.eq.s32.totalorder %v34, %v40
    %v43 = vsel %vm41, 1, 0
    %v44 = vsel %vm42, 1, 0
    %v45 = vcvt.s32.f32 %v43
    %v46 = vcvt.s32.f32 %v44
    %v47 = vpack.c.bf16 %v45, %v45
    %v48 = vpack.c.bf16 %v46, %v46
    %vm49 = vcmp.lt.s32.totalorder %v34, 32
    %v50 = vsel %vm49, 1, 0
    %vm51 = vcmp.eq.s32.totalorder %v50, 1
    %vm52 = vmpackc.low %vm51, %vm51
    %v53 = vsel %vm52, %v26, 0
    %v54 = vsel %vm52, %v27, 0
    %v55 = vld [vmem:[#allocation2] sm:$0xff]
    %v56 = vld [vmem:[#allocation2 + $0x8] sm:$0xff]
    %57 = vmatprep.subr.bf16.mxu0 0
    %58 = vmatpush1.bf16.xpose.msra.mxu0 0
    %59 = vmatprep.subr.bf16.mxu0 0
    %60 = vmatpush1.bf16.xpose.msra.mxu0 0
    %61 = vmatprep.subr.bf16.mxu0 0
    %62 = vmatpush1.bf16.xpose.msra.mxu0 0
    %63 = vmatprep.subr.bf16.mxu0 0
    %64 = vmatpush1.bf16.xpose.msra.mxu0 0
    %65 = vmatprep.subr.bf16.mxu0 0
    %66 = vmatpush1.bf16.xpose.msra.mxu0 0
    %67 = vmatprep.subr.bf16.mxu0 0
    %68 = vmatpush1.bf16.xpose.msra.mxu0 0
    %69 = vmatprep.subr.bf16.mxu0 0
    %70 = vmatpush1.bf16.xpose.msra.mxu0 0
    %71 = vmatprep.subr.bf16.mxu0 0
    %72 = vmatpush1.bf16.xpose.msra.mxu0 %v47
    %73 = vmatprep.subr.bf16.mxu0 0
    %74 = vmatpush2.bf16.xpose.msra.mxu0 0
    %75 = vmatprep.subr.bf16.mxu0 0
    %76 = vmatpush2.bf16.xpose.msra.mxu0 0
    %77 = vmatprep.subr.bf16.mxu0 0
    %78 = vmatpush2.bf16.xpose.msra.mxu0 0
    %79 = vmatprep.subr.bf16.mxu0 0
    %80 = vmatpush2.bf16.xpose.msra.mxu0 0
    %81 = vmatprep.subr.bf16.mxu0 0
    %82 = vmatpush2.bf16.xpose.msra.mxu0 0
    %83 = vmatprep.subr.bf16.mxu0 0
    %84 = vmatpush2.bf16.xpose.msra.mxu0 0
    %85 = vmatprep.subr.bf16.mxu0 0
    %86 = vmatpush2.bf16.xpose.msra.mxu0 0
    %87 = vmatprep.subr.bf16.mxu0 0
    %88 = vmatpush2.bf16.xpose.msra.mxu0 0
    %89 = vmatprep.mubr.bf16.mxu0 0
    %90 = vmatmul.mubr.bf16.gmra.mxu0 %v53
    %v91 = vpop.f32.mrf.mxu0
    %v92 = vadd.f32 0.0, %v91
    %v93 = vpop.f32.mrf.mxu0
    %v94 = vpop.f32.mrf.mxu0
    %v95 = vpop.f32.mrf.mxu0
    %96 = vdwg.mxu0
    %97 = vmatprep.subr.bf16.mxu0 0
    %98 = vmatpush1.bf16.xpose.msra.mxu0 0
    %99 = vmatprep.subr.bf16.mxu0 0
    %100 = vmatpush1.bf16.xpose.msra.mxu0 0
    %101 = vmatprep.subr.bf16.mxu0 0
    %102 = vmatpush1.bf16.xpose.msra.mxu0 0
    %103 = vmatprep.subr.bf16.mxu0 0
    %104 = vmatpush1.bf16.xpose.msra.mxu0 0
    %105 = vmatprep.subr.bf16.mxu0 0
    %106 = vmatpush1.bf16.xpose.msra.mxu0 0
    %107 = vmatprep.subr.bf16.mxu0 0
    %108 = vmatpush1.bf16.xpose.msra.mxu0 0
    %109 = vmatprep.subr.bf16.mxu0 0
    %110 = vmatpush1.bf16.xpose.msra.mxu0 0
    %111 = vmatprep.subr.bf16.mxu0 0
    %112 = vmatpush1.bf16.xpose.msra.mxu0 %v48
    %113 = vmatprep.subr.bf16.mxu0 0
    %114 = vmatpush2.bf16.xpose.msra.mxu0 0
    %115 = vmatprep.subr.bf16.mxu0 0
    %116 = vmatpush2.bf16.xpose.msra.mxu0 0
    %117 = vmatprep.subr.bf16.mxu0 0
    %118 = vmatpush2.bf16.xpose.msra.mxu0 0
    %119 = vmatprep.subr.bf16.mxu0 0
    %120 = vmatpush2.bf16.xpose.msra.mxu0 0
    %121 = vmatprep.subr.bf16.mxu0 0
    %122 = vmatpush2.bf16.xpose.msra.mxu0 0
    %123 = vmatprep.subr.bf16.mxu0 0
    %124 = vmatpush2.bf16.xpose.msra.mxu0 0
    %125 = vmatprep.subr.bf16.mxu0 0
    %126 = vmatpush2.bf16.xpose.msra.mxu0 0
    %127 = vmatprep.subr.bf16.mxu0 0
    %128 = vmatpush2.bf16.xpose.msra.mxu0 0
    %129 = vmatprep.mubr.bf16.mxu0 0
    %130 = vmatmul.mubr.bf16.gmra.mxu0 %v54
    %v131 = vpop.f32.mrf.mxu0
    %v132 = vadd.f32 0.0, %v131
    %v133 = vpop.f32.mrf.mxu0
    %v134 = vpop.f32.mrf.mxu0
    %v135 = vpop.f32.mrf.mxu0
    %136 = vdwg.mxu0
    %v137 = vadd.f32 %v55, %v92
    %v138 = vadd.f32 %v56, %v132
    %vm139 = vcmask 64512
    %140 = vst.msk [vmem:[#allocation2] sm:$0xff] %vm139, %v137
    %141 = vst.msk [vmem:[#allocation2 + $0x8] sm:$0xff] %vm139, %v138
    // Predicated region
    $region22: #{tpu_custom_call.1} parent=1 // pred_check
      %p142 = pneg %p19
    $region23: #{tpu_custom_call.1} parent=1 // pred_check_branch
      %144 = sbr.rel (%p142) target = $region25
    $region24: #{tpu_custom_call.1} parent=1 // pred_region
      %v145 = vld [vmem:[#allocation2] sm:$0xff]
      %v146 = vld [vmem:[#allocation2 + $0x8] sm:$0xff]
      %v147 = vld [vmem:[%s2] sm:$0x1]
      %v148 = vld [vmem:[%s2 + $0x1] sm:$0x1]
      %v149 = vld [vmem:[%s3] sm:$0x1]
      %v150 = vld [vmem:[%s3 + $0x1] sm:$0x1]
      %v151 = vlaneseq
      %v152 = vshrl.u32 %v151, 7
      %v153 = vsub.s32 %v32, %v152
      %v154 = vrot.slane %v37, %v153
      %v155 = vlaneseq
      %v156 = vshrl.u32 %v155, 7
      %v157 = vsub.s32 %v32, %v156
      %v158 = vrot.slane %v40, %v157
      %vm159 = vcmask 1042434
      %v160 = vsel %vm159, %v154, %v154
      %vm161 = vcmask 1043459
      %v162 = vsel %vm161, %v154, %v160
      %vm163 = vcmask 1044484
      %v164 = vsel %vm163, %v154, %v162
      %vm165 = vcmask 1045509
      %v166 = vsel %vm165, %v154, %v164
      %vm167 = vcmask 1046534
      %v168 = vsel %vm167, %v154, %v166
      %vm169 = vcmask 1047559
      %v170 = vsel %vm169, %v154, %v168
      %v171 = vsel %vm159, %v158, %v158
      %v172 = vsel %vm161, %v158, %v171
      %v173 = vsel %vm163, %v158, %v172
      %v174 = vsel %vm165, %v158, %v173
      %v175 = vsel %vm167, %v158, %v174
      %v176 = vsel %vm169, %v158, %v175
      %vm177 = vcmp.eq.s32.totalorder %v37, %v170
      %vm178 = vcmp.eq.s32.totalorder %v40, %v176
      %v179 = vsel %vm177, 1, 0
      %v180 = vsel %vm178, 1, 0
      %v181 = vcvt.s32.f32 %v179
      %v182 = vcvt.s32.f32 %v180
      %v183 = vlaneseq
      %v184 = vshrl.u32 %v183, 7
      %v185 = vsub.s32 0, %v184
      %v186 = vrot.slane %v147, %v185
      %188 = vbcast.lane.b32.xlu0 %v186, 256
      %v189 = vpop.permute.xlu0 %188
      %s191 = sor.u32 256, 8
      %192 = vbcast.lane.b32.xlu0 %v186, %s191
      %v193 = vpop.permute.xlu0 %192
      %v194 = vlaneseq
      %v195 = vshrl.u32 %v194, 7
      %v196 = vsub.s32 0, %v195
      %v197 = vrot.slane %v148, %v196
      %199 = vbcast.lane.b32.xlu0 %v197, 256
      %v200 = vpop.permute.xlu0 %199
      %s202 = sor.u32 256, 8
      %203 = vbcast.lane.b32.xlu0 %v197, %s202
      %v204 = vpop.permute.xlu0 %203
      %v207 = vlaneseq
      %v208 = vshrl.u32 %v207, 7
      %v209 = vsub.s32 0, %v208
      %v210 = vrot.slane %v149, %v209
      %v211 = vlaneseq
      %v212 = vshrl.u32 %v211, 7
      %v213 = vsub.s32 0, %v212
      %v214 = vrot.slane %v150, %v213
      %v217 = vmul.f32 %v189, %v210
      %v218 = vmul.f32 %v193, %v210
      %v219 = vmul.f32 %v200, %v214
      %v220 = vmul.f32 %v204, %v214
      %v221 = vlaneseq
      %v222 = vshrl.u32 %v221, 7
      %v223 = vsub.s32 0, %v222
      %v224 = vrot.slane %v149, %v223
      %226 = vbcast.lane.b32.xlu0 %v224, 256
      %v227 = vpop.permute.xlu0 %226
      %s229 = sor.u32 256, 8
      %230 = vbcast.lane.b32.xlu0 %v224, %s229
      %v231 = vpop.permute.xlu0 %230
      %v232 = vlaneseq
      %v233 = vshrl.u32 %v232, 7
      %v234 = vsub.s32 0, %v233
      %v235 = vrot.slane %v150, %v234
      %237 = vbcast.lane.b32.xlu0 %v235, 256
      %v238 = vpop.permute.xlu0 %237
      %s240 = sor.u32 256, 8
      %241 = vbcast.lane.b32.xlu0 %v235, %s240
      %v242 = vpop.permute.xlu0 %241
      %v243 = vmin.f32 %v227, %v210
      %v244 = vmin.f32 %v231, %v210
      %v245 = vmin.f32 %v238, %v214
      %v246 = vmin.f32 %v242, %v214
      %vm251 = vcmask 1046528
      %v252 = vrot.slane %v217, 1
      %v253 = vrot.slane %v218, 1
      %v254 = vsel %vm251, %v252, %v253
      %v255 = vrot.slane %v219, 1
      %v256 = vrot.slane %v220, 1
      %v257 = vsel %vm251, %v255, %v256
      %258 = vrot.lane.b32.xlu0 %v254, 127
      %v259 = vpop.permute.xlu0 %258
      %260 = vrot.lane.b32.xlu0 %v257, 127
      %v261 = vpop.permute.xlu0 %260
      %v264 = vmul.f32 %v145, %v259
      %v265 = vmul.f32 %v146, %v261
      %v270 = vrot.slane %v243, 1
      %v271 = vrot.slane %v244, 1
      %v272 = vsel %vm251, %v270, %v271
      %v273 = vrot.slane %v245, 1
      %v274 = vrot.slane %v246, 1
      %v275 = vsel %vm251, %v273, %v274
      %276 = vrot.lane.b32.xlu0 %v272, 127
      %v277 = vpop.permute.xlu0 %276
      %278 = vrot.lane.b32.xlu0 %v275, 127
      %v279 = vpop.permute.xlu0 %278
      %v282 = vmul.f32 %v181, %v277
      %v283 = vmul.f32 %v182, %v279
      %v284 = vsel %vm139, %v264, 0.0
      %v285 = vrot.slane %v284, 4
      %v286 = vadd.f32 %v284, %v285
      %v287 = vrot.slane %v286, 2
      %v288 = vadd.f32 %v286, %v287
      %v289 = vrot.slane %v288, 1
      %v290 = vadd.f32 %v288, %v289
      %v291 = vsel %vm139, %v265, 0.0
      %v292 = vrot.slane %v291, 4
      %v293 = vadd.f32 %v291, %v292
      %v294 = vrot.slane %v293, 2
      %v295 = vadd.f32 %v293, %v294
      %v296 = vrot.slane %v295, 1
      %v297 = vadd.f32 %v295, %v296
      %v298 = vsel %vm139, %v282, 0.0
      %v299 = vrot.slane %v298, 4
      %v300 = vadd.f32 %v298, %v299
      %v301 = vrot.slane %v300, 2
      %v302 = vadd.f32 %v300, %v301
      %v303 = vrot.slane %v302, 1
      %v304 = vadd.f32 %v302, %v303
      %v305 = vsel %vm139, %v283, 0.0
      %v306 = vrot.slane %v305, 4
      %v307 = vadd.f32 %v305, %v306
      %v308 = vrot.slane %v307, 2
      %v309 = vadd.f32 %v307, %v308
      %v310 = vrot.slane %v309, 1
      %v311 = vadd.f32 %v309, %v310
      %v312 = vmax.f32 %v304, 1.0
      %v313 = vmax.f32 %v311, 1.0
      %v314 = vrcp.pop %v312
      %v315 = vrcp.pop %v313
      %v316 = vsub.f32 %v290, %v264
      %v317 = vsub.f32 %v297, %v265
      %v318 = vadd.f32 %v316, 1.0
      %v319 = vadd.f32 %v317, 1.0
      %v320 = vrcp.pop %v318
      %v321 = vrcp.pop %v319
      %v322 = vmul.f32 %v304, %v320
      %v323 = vmul.f32 %v311, %v321
      %v324 = vmin.f32 %v322, 1.0
      %v325 = vmin.f32 %v323, 1.0
      %v326 = vmul.f32 %v324, %v264
      %v327 = vmul.f32 %v325, %v265
      %v328 = vmul.f32 %v326, %v314
      %v329 = vmul.f32 %v327, %v315
      %v330 = vsel %vm139, %v328, 0.0
      %331 = vadd.xlane.f32.xlu0 %v330
      %v332 = vpop.xlane.xlu0 %331
      %v333 = vsel %vm139, %v329, 0.0
      %334 = vadd.xlane.f32.xlu0 %v333
      %v335 = vpop.xlane.xlu0 %334
      %v336 = vrot.slane %v332, 4
      %v337 = vadd.f32 %v332, %v336
      %v338 = vrot.slane %v337, 2
      %v339 = vadd.f32 %v337, %v338
      %v340 = vrot.slane %v339, 1
      %v341 = vadd.f32 %v339, %v340
      %v342 = vrot.slane %v335, 4
      %v343 = vadd.f32 %v335, %v342
      %v344 = vrot.slane %v343, 2
      %v345 = vadd.f32 %v343, %v344
      %v346 = vrot.slane %v345, 1
      %v347 = vadd.f32 %v345, %v346
      %vm348 = vcmp.eq.s32.totalorder %v32, 0
      %v349 = vsel %vm348, %v341, 0.0
      %v350 = vsel %vm348, %v347, 0.0
      %v351 = vadd.f32 %v349, 0.0
      %v352 = vadd.f32 %v350, 0.0
      %v355 = vrot.slane %v264, 1
      %v356 = vrot.slane %v265, 1
      %357 = vrot.lane.b32.xlu0 %v355, 127
      %v358 = vpop.permute.xlu0 %357
      %359 = vrot.lane.b32.xlu0 %v356, 127
      %v360 = vpop.permute.xlu0 %359
      %v363 = vmul.f32 %v145, %v358
      %v364 = vmul.f32 %v146, %v360
      %v367 = vrot.slane %v282, 1
      %v368 = vrot.slane %v283, 1
      %369 = vrot.lane.b32.xlu0 %v367, 127
      %v370 = vpop.permute.xlu0 %369
      %371 = vrot.lane.b32.xlu0 %v368, 127
      %v372 = vpop.permute.xlu0 %371
      %v375 = vmul.f32 %v181, %v370
      %v376 = vmul.f32 %v182, %v372
      %vm377 = vcmask 55296
      %v378 = vsel %vm377, %v363, 0.0
      %v379 = vrot.slane %v378, 4
      %v380 = vadd.f32 %v378, %v379
      %v381 = vrot.slane %v380, 2
      %v382 = vadd.f32 %v380, %v381
      %v383 = vrot.slane %v382, 1
      %v384 = vadd.f32 %v382, %v383
      %v385 = vsel %vm377, %v364, 0.0
      %v386 = vrot.slane %v385, 4
      %v387 = vadd.f32 %v385, %v386
      %v388 = vrot.slane %v387, 2
      %v389 = vadd.f32 %v387, %v388
      %v390 = vrot.slane %v389, 1
      %v391 = vadd.f32 %v389, %v390
      %v392 = vsel %vm377, %v375, 0.0
      %v393 = vrot.slane %v392, 4
      %v394 = vadd.f32 %v392, %v393
      %v395 = vrot.slane %v394, 2
      %v396 = vadd.f32 %v394, %v395
      %v397 = vrot.slane %v396, 1
      %v398 = vadd.f32 %v396, %v397
      %v399 = vsel %vm377, %v376, 0.0
      %v400 = vrot.slane %v399, 4
      %v401 = vadd.f32 %v399, %v400
      %v402 = vrot.slane %v401, 2
      %v403 = vadd.f32 %v401, %v402
      %v404 = vrot.slane %v403, 1
      %v405 = vadd.f32 %v403, %v404
      %v406 = vmax.f32 %v398, 1.0
      %v407 = vmax.f32 %v405, 1.0
      %v408 = vrcp.pop %v406
      %v409 = vrcp.pop %v407
      %v410 = vsub.f32 %v384, %v363
      %v411 = vsub.f32 %v391, %v364
      %v412 = vadd.f32 %v410, 1.0
      %v413 = vadd.f32 %v411, 1.0
      %v414 = vrcp.pop %v412
      %v415 = vrcp.pop %v413
      %v416 = vmul.f32 %v398, %v414
      %v417 = vmul.f32 %v405, %v415
      %v418 = vmin.f32 %v416, 1.0
      %v419 = vmin.f32 %v417, 1.0
      %v420 = vmul.f32 %v418, %v363
      %v421 = vmul.f32 %v419, %v364
      %v422 = vmul.f32 %v420, %v408
      %v423 = vmul.f32 %v421, %v409
      %v424 = vsel %vm377, %v422, 0.0
      %425 = vadd.xlane.f32.xlu0 %v424
      %v426 = vpop.xlane.xlu0 %425
      %v427 = vsel %vm377, %v423, 0.0
      %428 = vadd.xlane.f32.xlu0 %v427
      %v429 = vpop.xlane.xlu0 %428
      %v430 = vsel %vm251, %v426, 0.0
      %v431 = vrot.slane %v430, 4
      %v432 = vadd.f32 %v430, %v431
      %v433 = vrot.slane %v432, 2
      %v434 = vadd.f32 %v432, %v433
      %v435 = vrot.slane %v434, 1
      %v436 = vadd.f32 %v434, %v435
      %v437 = vsel %vm251, %v429, 0.0
      %v438 = vrot.slane %v437, 4
      %v439 = vadd.f32 %v437, %v438
      %v440 = vrot.slane %v439, 2
      %v441 = vadd.f32 %v439, %v440
      %v442 = vrot.slane %v441, 1
      %v443 = vadd.f32 %v441, %v442
      %vm444 = vcmp.eq.s32.totalorder %v32, 1
      %v445 = vsel %vm444, %v436, 0.0
      %v446 = vsel %vm444, %v443, 0.0
      %v447 = vadd.f32 %v351, %v445
      %v448 = vadd.f32 %v352, %v446
      %v451 = vrot.slane %v363, 1
      %v452 = vrot.slane %v364, 1
      %453 = vrot.lane.b32.xlu0 %v451, 127
      %v454 = vpop.permute.xlu0 %453
      %455 = vrot.lane.b32.xlu0 %v452, 127
      %v456 = vpop.permute.xlu0 %455
      %v459 = vmul.f32 %v145, %v454
      %v460 = vmul.f32 %v146, %v456
      %v463 = vrot.slane %v375, 1
      %v464 = vrot.slane %v376, 1
      %465 = vrot.lane.b32.xlu0 %v463, 127
      %v466 = vpop.permute.xlu0 %465
      %467 = vrot.lane.b32.xlu0 %v464, 127
      %v468 = vpop.permute.xlu0 %467
      %v471 = vmul.f32 %v181, %v466
      %v472 = vmul.f32 %v182, %v468
      %vm473 = vcmask 46080
      %v474 = vsel %vm473, %v459, 0.0
      %v475 = vrot.slane %v474, 4
      %v476 = vadd.f32 %v474, %v475
      %v477 = vrot.slane %v476, 2
      %v478 = vadd.f32 %v476, %v477
      %v479 = vrot.slane %v478, 1
      %v480 = vadd.f32 %v478, %v479
      %v481 = vsel %vm473, %v460, 0.0
      %v482 = vrot.slane %v481, 4
      %v483 = vadd.f32 %v481, %v482
      %v484 = vrot.slane %v483, 2
      %v485 = vadd.f32 %v483, %v484
      %v486 = vrot.slane %v485, 1
      %v487 = vadd.f32 %v485, %v486
      %v488 = vsel %vm473, %v471, 0.0
      %v489 = vrot.slane %v488, 4
      %v490 = vadd.f32 %v488, %v489
      %v491 = vrot.slane %v490, 2
      %v492 = vadd.f32 %v490, %v491
      %v493 = vrot.slane %v492, 1
      %v494 = vadd.f32 %v492, %v493
      %v495 = vsel %vm473, %v472, 0.0
      %v496 = vrot.slane %v495, 4
      %v497 = vadd.f32 %v495, %v496
      %v498 = vrot.slane %v497, 2
      %v499 = vadd.f32 %v497, %v498
      %v500 = vrot.slane %v499, 1
      %v501 = vadd.f32 %v499, %v500
      %v502 = vmax.f32 %v494, 1.0
      %v503 = vmax.f32 %v501, 1.0
      %v504 = vrcp.pop %v502
      %v505 = vrcp.pop %v503
      %v506 = vsub.f32 %v480, %v459
      %v507 = vsub.f32 %v487, %v460
      %v508 = vadd.f32 %v506, 1.0
      %v509 = vadd.f32 %v507, 1.0
      %v510 = vrcp.pop %v508
      %v511 = vrcp.pop %v509
      %v512 = vmul.f32 %v494, %v510
      %v513 = vmul.f32 %v501, %v511
      %v514 = vmin.f32 %v512, 1.0
      %v515 = vmin.f32 %v513, 1.0
      %v516 = vmul.f32 %v514, %v459
      %v517 = vmul.f32 %v515, %v460
      %v518 = vmul.f32 %v516, %v504
      %v519 = vmul.f32 %v517, %v505
      %v520 = vsel %vm473, %v518, 0.0
      %521 = vadd.xlane.f32.xlu0 %v520
      %v522 = vpop.xlane.xlu0 %521
      %v523 = vsel %vm473, %v519, 0.0
      %524 = vadd.xlane.f32.xlu0 %v523
      %v525 = vpop.xlane.xlu0 %524
      %vm526 = vcmask 1045504
      %v527 = vsel %vm526, %v522, 0.0
      %v528 = vrot.slane %v527, 4
      %v529 = vadd.f32 %v527, %v528
      %v530 = vrot.slane %v529, 2
      %v531 = vadd.f32 %v529, %v530
      %v532 = vrot.slane %v531, 1
      %v533 = vadd.f32 %v531, %v532
      %v534 = vsel %vm526, %v525, 0.0
      %v535 = vrot.slane %v534, 4
      %v536 = vadd.f32 %v534, %v535
      %v537 = vrot.slane %v536, 2
      %v538 = vadd.f32 %v536, %v537
      %v539 = vrot.slane %v538, 1
      %v540 = vadd.f32 %v538, %v539
      %vm541 = vcmp.eq.s32.totalorder %v32, 2
      %v542 = vsel %vm541, %v533, 0.0
      %v543 = vsel %vm541, %v540, 0.0
      %v544 = vadd.f32 %v447, %v542
      %v545 = vadd.f32 %v448, %v543
      %v548 = vrot.slane %v459, 1
      %v549 = vrot.slane %v460, 1
      %550 = vrot.lane.b32.xlu0 %v548, 127
      %v551 = vpop.permute.xlu0 %550
      %552 = vrot.lane.b32.xlu0 %v549, 127
      %v553 = vpop.permute.xlu0 %552
      %v556 = vmul.f32 %v145, %v551
      %v557 = vmul.f32 %v146, %v553
      %v560 = vrot.slane %v471, 1
      %v561 = vrot.slane %v472, 1
      %562 = vrot.lane.b32.xlu0 %v560, 127
      %v563 = vpop.permute.xlu0 %562
      %564 = vrot.lane.b32.xlu0 %v561, 127
      %v565 = vpop.permute.xlu0 %564
      %v568 = vmul.f32 %v181, %v563
      %v569 = vmul.f32 %v182, %v565
      %vm570 = vcmask 36864
      %v571 = vsel %vm570, %v556, 0.0
      %v572 = vrot.slane %v571, 4
      %v573 = vadd.f32 %v571, %v572
      %v574 = vrot.slane %v573, 2
      %v575 = vadd.f32 %v573, %v574
      %v576 = vrot.slane %v575, 1
      %v577 = vadd.f32 %v575, %v576
      %v578 = vsel %vm570, %v557, 0.0
      %v579 = vrot.slane %v578, 4
      %v580 = vadd.f32 %v578, %v579
      %v581 = vrot.slane %v580, 2
      %v582 = vadd.f32 %v580, %v581
      %v583 = vrot.slane %v582, 1
      %v584 = vadd.f32 %v582, %v583
      %v585 = vsel %vm570, %v568, 0.0
      %v586 = vrot.slane %v585, 4
      %v587 = vadd.f32 %v585, %v586
      %v588 = vrot.slane %v587, 2
      %v589 = vadd.f32 %v587, %v588
      %v590 = vrot.slane %v589, 1
      %v591 = vadd.f32 %v589, %v590
      %v592 = vsel %vm570, %v569, 0.0
      %v593 = vrot.slane %v592, 4
      %v594 = vadd.f32 %v592, %v593
      %v595 = vrot.slane %v594, 2
      %v596 = vadd.f32 %v594, %v595
      %v597 = vrot.slane %v596, 1
      %v598 = vadd.f32 %v596, %v597
      %v599 = vmax.f32 %v591, 1.0
      %v600 = vmax.f32 %v598, 1.0
      %v601 = vrcp.pop %v599
      %v602 = vrcp.pop %v600
      %v603 = vsub.f32 %v577, %v556
      %v604 = vsub.f32 %v584, %v557
      %v605 = vadd.f32 %v603, 1.0
      %v606 = vadd.f32 %v604, 1.0
      %v607 = vrcp.pop %v605
      %v608 = vrcp.pop %v606
      %v609 = vmul.f32 %v591, %v607
      %v610 = vmul.f32 %v598, %v608
      %v611 = vmin.f32 %v609, 1.0
      %v612 = vmin.f32 %v610, 1.0
      %v613 = vmul.f32 %v611, %v556
      %v614 = vmul.f32 %v612, %v557
      %v615 = vmul.f32 %v613, %v601
      %v616 = vmul.f32 %v614, %v602
      %v617 = vsel %vm570, %v615, 0.0
      %618 = vadd.xlane.f32.xlu0 %v617
      %v619 = vpop.xlane.xlu0 %618
      %v620 = vsel %vm570, %v616, 0.0
      %621 = vadd.xlane.f32.xlu0 %v620
      %v622 = vpop.xlane.xlu0 %621
      %vm623 = vcmask 1044480
      %v624 = vsel %vm623, %v619, 0.0
      %v625 = vrot.slane %v624, 4
      %v626 = vadd.f32 %v624, %v625
      %v627 = vrot.slane %v626, 2
      %v628 = vadd.f32 %v626, %v627
      %v629 = vrot.slane %v628, 1
      %v630 = vadd.f32 %v628, %v629
      %v631 = vsel %vm623, %v622, 0.0
      %v632 = vrot.slane %v631, 4
      %v633 = vadd.f32 %v631, %v632
      %v634 = vrot.slane %v633, 2
      %v635 = vadd.f32 %v633, %v634
      %v636 = vrot.slane %v635, 1
      %v637 = vadd.f32 %v635, %v636
      %vm638 = vcmp.eq.s32.totalorder %v32, 3
      %v639 = vsel %vm638, %v630, 0.0
      %v640 = vsel %vm638, %v637, 0.0
      %v641 = vadd.f32 %v544, %v639
      %v642 = vadd.f32 %v545, %v640
      %vm643 = vcmask 24576
      %644 = vst.msk [vmem:[#allocation3] sm:$0x1] %vm643, %v641
      %645 = vst.msk [vmem:[#allocation3 + $0x1] sm:$0x1] %vm643, %v642
    $region25: #{tpu_custom_call.1} parent=1 // pred_fallthru
      _
    // Predicated region
    $region26: #{tpu_custom_call.1} parent=1 // pred_check
      _
    $region27: #{tpu_custom_call.1} parent=1 // pred_check_branch
      %647 = sbr.rel (0) target = $region29
    $region28: #{tpu_custom_call.1} parent=1 // pred_region
      %s649 = ssub.s32 32, 32
      %650 = vsyncadd [#allocation4], %s649
      %s651 = sshll.u32 [#allocation3], 4
      %s652 = int_to_ptr.vmem [resolvable:$true] %s651
      %657 = dma.vmem_to_hbm [thread:$0]  %s652, 32, %s4, [#allocation4], 16, 16, 1
    $region29: #{tpu_custom_call.1} parent=1 // pred_fallthru
      _
    // Predicated region
    $region30: #{tpu_custom_call.1} parent=1 // pred_check
      _
    $region31: #{tpu_custom_call.1} parent=1 // pred_check_branch
      %659 = sbr.rel (0) target = $region33
    $region32: #{tpu_custom_call.1} parent=1 // pred_region
      %660 = dma.done [#allocation4], 32
    $region33: #{tpu_custom_call.1} parent=1 // pred_fallthru
      _
    %661 = vsyncpa [#allocation4], 1

</llo_original>
